<compile_context>
chip_gen: v5e
topology: v5e:2x2
jax: 0.10.0
libtpu: 0.0.40
codegen_flags: <defaults>
</compile_context>

<pallas_src>
import functools

import jax
import jax.numpy as jnp
from jax.experimental import pallas as pl
from jax.experimental.pallas import tpu as pltpu


def _round_up(n, m):
    return (n + m - 1) // m * m


def _vmem_budget():
    """(per-step tile budget, scoped vmem limit) in bytes, generation-aware."""
    try:
        cap = pltpu.get_tpu_info().vmem_capacity_bytes
    except Exception:                 # info query unavailable -> assume small part
        cap = 64 << 20
    if cap >= (100 << 20):            # v5e / v6e: 128 MiB physical VMEM
        return 20 << 20, 64 << 20
    return 12 << 20, 48 << 20         # v7x: 64 MiB physical VMEM


def _pick_tile_r(n_rows, n_lanes, budget_bytes, itemsize, min_grid_steps=2):
    """Row-tile size.

    Multiple of the sublane packing (8 rows for 4-byte dtypes, 16 for 2-byte)
    unless it equals the full row extent.  Sized so double-buffered I/O plus
    the f32 working set fits `budget_bytes`, and capped so the grid has at
    least `min_grid_steps` steps whenever n_rows permits (v7x has 2 TCs and a
    1-step grid also defeats BlockSpec double-buffering).  Row over-processing
    is bounded by the sublane multiple, never by a full tile.
    """
    row_mult = 8 if itemsize >= 4 else 16
    per_row = n_lanes * (6 * itemsize + 6 * 4)     # dbuf I/O + f32 working set
    target = (budget_bytes // max(per_row, 1)) // row_mult * row_mult
    target = int(max(row_mult, min(target, 2048)))
    grid_n = max(pl.cdiv(n_rows, target),
                 min(min_grid_steps, n_rows // row_mult), 1)
    tile_r = pl.cdiv(n_rows, grid_n)
    if tile_r != n_rows:                           # blocked dims must be 8-aligned
        tile_r = _round_up(tile_r, row_mult)
    return int(tile_r)


def _decomp_roll_kernel(x_ref, res_ref, mean_ref, *, kernel_size, valid_len):
    """Moving average via per-tap lane rotations (lane extent % 128 == 0)."""
    x = x_ref[...]
    tile_r, l_tile = x.shape
    pad = (kernel_size - 1) // 2

    xf = x.astype(jnp.float32)
    # Hoisted full-tile broadcasts of the edge columns; JAX does not CSE
    # broadcast_in_dim, so build them once and reuse in every select.
    left = jnp.broadcast_to(xf[:, 0:1], (tile_r, l_tile))
    right = jnp.broadcast_to(xf[:, valid_len - 1:valid_len], (tile_r, l_tile))
    col = jax.lax.broadcasted_iota(jnp.int32, (tile_r, l_tile), 1)

    # TODO(synk): for very large kernel_size a lane-axis prefix sum would
    # replace the K-tap chain with O(log L) XLU work.
    acc = xf                                       # centre tap needs no clamp
    for d in range(1, pad + 1):                    # static unroll; K is small
        # +d tap: tap[:, i] = x[:, i + d]; only the right edge can clamp.
        s = (-d) % l_tile
        tap = pltpu.roll(xf, shift=s, axis=1) if s else xf
        acc = acc + jnp.where(col >= valid_len - d, right, tap)
        # -d tap: tap[:, i] = x[:, i - d]; only the left edge can clamp.
        s = d % l_tile
        tap = pltpu.roll(xf, shift=s, axis=1) if s else xf
        acc = acc + jnp.where(col < d, left, tap)

    mean = acc * (1.0 / kernel_size)
    mean_ref[...] = mean.astype(mean_ref.dtype)
    res_ref[...] = (xf - mean).astype(res_ref.dtype)


def _decomp_band_kernel(x_ref, w_ref, res_ref, mean_ref, *, inv_k):
    """Moving average as a banded matmul on the (otherwise idle) MXU."""
    xf = x_ref[...].astype(jnp.float32)
    mean = jnp.dot(
        xf, w_ref[...],
        preferred_element_type=jnp.float32,
        precision=jax.lax.Precision.HIGHEST,   # keep ~f32 accuracy on the MXU
    ) * inv_k
    mean_ref[...] = mean.astype(mean_ref.dtype)
    res_ref[...] = (xf - mean).astype(res_ref.dtype)


def _band_matrix(L, kernel_size):
    """(L, L) f32 matrix: W[j, i] = multiplicity of input j in the
    replicate-padded average window of output i, so mean = (x @ W) / K."""
    pad = (kernel_size - 1) // 2
    idx = jnp.arange(L)
    j = idx[:, None]
    i = idx[None, :]
    w = ((j >= i - pad) & (j <= i + pad)).astype(jnp.float32)
    w = w.at[0, :].add(jnp.maximum(0, pad - idx).astype(jnp.float32))
    w = w.at[L - 1, :].add(jnp.maximum(0, idx + pad - (L - 1)).astype(jnp.float32))
    return w


def _pallas_decomp(x2, kernel_size, *, use_band, valid_len, budget, vmem_limit):
    """Run the decomposition kernel on a (R, Lw) array; no HBM padding here."""
    R, Lw = x2.shape
    itemsize = jnp.dtype(x2.dtype).itemsize
    w_bytes = 2 * Lw * Lw * 4 if use_band else 0        # double-buffered W
    tile_r = _pick_tile_r(R, Lw, max(budget - w_bytes, 2 << 20), itemsize)
    grid = (pl.cdiv(R, tile_r),)

    row_spec = pl.BlockSpec((tile_r, Lw), lambda i: (i, 0))
    out_shape = (jax.ShapeDtypeStruct((R, Lw), x2.dtype),
                 jax.ShapeDtypeStruct((R, Lw), x2.dtype))
    cparams = pltpu.CompilerParams(
        dimension_semantics=("parallel",),
        vmem_limit_bytes=vmem_limit,
    )

    if use_band:
        w = _band_matrix(Lw, kernel_size)
        kernel = functools.partial(_decomp_band_kernel, inv_k=1.0 / kernel_size)
        return pl.pallas_call(
            kernel,
            grid=grid,
            in_specs=[row_spec, pl.BlockSpec((Lw, Lw), lambda i: (0, 0))],
            out_specs=(row_spec, row_spec),
            out_shape=out_shape,
            compiler_params=cparams,
        )(x2, w)

    kernel = functools.partial(_decomp_roll_kernel,
                               kernel_size=kernel_size, valid_len=valid_len)
    return pl.pallas_call(
        kernel,
        grid=grid,
        in_specs=[row_spec],
        out_specs=(row_spec, row_spec),
        out_shape=out_shape,
        compiler_params=cparams,
    )(x2)


def series_decomp(x, kernel_size):
    """x: [B, C, L] -> (res, moving_mean), both [B, C, L]."""
    assert kernel_size % 2 == 1, (
        "odd kernel_size required (PyTorch code assumes length-preserving pooling)")
    B, C, L = x.shape
    R = B * C
    x2 = x.reshape(R, L)
    budget, vmem_limit = _vmem_budget()

    def padded_roll():
        # Conservative path: lane-pad to a multiple of 128 so every rotate is
        # aligned, at the cost of one extra HBM round trip for pad + slice.
        # TODO(synk): a lane-axis prefix-sum kernel would remove this round
        # trip for very long, non-128-aligned sequences.
        l_pad = _round_up(L, 128)
        xp = jnp.pad(x2, ((0, 0), (0, l_pad - L)))
        r, m = _pallas_decomp(xp, kernel_size, use_band=False, valid_len=L,
                              budget=budget, vmem_limit=vmem_limit)
        return r[:, :L], m[:, :L]

    if L % 128 == 0:
        res, mean = _pallas_decomp(x2, kernel_size, use_band=False, valid_len=L,
                                   budget=budget, vmem_limit=vmem_limit)
    elif 2 * L * L * 4 <= min(budget, 8 << 20):
        try:
            res, mean = _pallas_decomp(x2, kernel_size, use_band=True,
                                       valid_len=L, budget=budget,
                                       vmem_limit=vmem_limit)
        except Exception:
            # Robustness valve: if the MXU-band variant fails to lower on this
            # toolchain/generation, fall back to the known-good padded kernel.
            res, mean = padded_roll()
    else:
        res, mean = padded_roll()

    return res.reshape(B, C, L), mean.reshape(B, C, L)


def _reference(x, kernel_size):
    """Pure-JAX reference mirroring the PyTorch forward."""
    pad = (kernel_size - 1) // 2
    front = jnp.repeat(x[:, :, 0:1], pad, axis=-1)
    end = jnp.repeat(x[:, :, -1:], pad, axis=-1)
    xp = jnp.concatenate([front, x, end], axis=-1)
    L = x.shape[-1]
    mean = sum(xp[:, :, j:j + L] for j in range(kernel_size)) / kernel_size
    return x - mean, mean


if __name__ == "__main__":
    key = jax.random.PRNGKey(0)

    # Case 1: small canonical shape (unaligned L -> MXU band path).
    B, C, L, k = 2, 4, 16, 5
    x = jax.random.normal(key, (B, C, L), dtype=jnp.float32)
    res, mean = series_decomp(x, k)
    jax.block_until_ready((res, mean))
    res_ref, mean_ref = _reference(x, k)
    assert res.shape == (B, C, L) and mean.shape == (B, C, L)
    assert jnp.allclose(mean, mean_ref, atol=1e-5, rtol=1e-5)
    assert jnp.allclose(res, res_ref, atol=1e-5, rtol=1e-5)

    # Case 2: R not a multiple of 8, L not of 128 (full-extent row block).
    B2, C2, L2, k2 = 2, 3, 20, 7
    x2 = jax.random.normal(jax.random.PRNGKey(1), (B2, C2, L2), dtype=jnp.float32)
    res2, mean2 = series_decomp(x2, k2)
    jax.block_until_ready((res2, mean2))
    res2_ref, mean2_ref = _reference(x2, k2)
    assert jnp.allclose(mean2, mean2_ref, atol=1e-5, rtol=1e-5)
    assert jnp.allclose(res2, res2_ref, atol=1e-5, rtol=1e-5)

    # Case 3: 128-aligned L -> lane-rotate path, larger kernel_size.
    B3, C3, L3, k3 = 2, 4, 256, 25
    x3 = jax.random.normal(jax.random.PRNGKey(2), (B3, C3, L3), dtype=jnp.float32)
    res3, mean3 = series_decomp(x3, k3)
    jax.block_until_ready((res3, mean3))
    res3_ref, mean3_ref = _reference(x3, k3)
    assert jnp.allclose(mean3, mean3_ref, atol=1e-5, rtol=1e-5)
    assert jnp.allclose(res3, res3_ref, atol=1e-5, rtol=1e-5)

    print("KERNEL_OK")
</pallas_src>

<mosaic_0001>
module attributes {stable_mosaic.version = 11 : i64} {
  func.func @_decomp_band_kernel(%arg0: i32, %arg1: memref<8x16xf32, #tpu.memory_space<vmem>>, %arg2: memref<16x16xf32, #tpu.memory_space<vmem>>, %arg3: memref<8x16xf32, #tpu.memory_space<vmem>>, %arg4: memref<8x16xf32, #tpu.memory_space<vmem>>) attributes {dimension_semantics = [#tpu.dimension_semantics<parallel>], iteration_bounds = array<i64: 1>, scalar_prefetch = 0 : i64, scratch_operands = 0 : i64, tpu.core_type = #tpu.core_type<tc>, window_params = [{transform_indices = @transform_0, window_bounds = array<i64: 8, 16>}, {pipeline_mode = #tpu.pipeline_mode<synchronous>, transform_indices = @transform_1, window_bounds = array<i64: 16, 16>}, {transform_indices = @transform_2, window_bounds = array<i64: 8, 16>}, {transform_indices = @transform_3, window_bounds = array<i64: 8, 16>}]} {
    %c0 = arith.constant 0 : index
    %c0_0 = arith.constant 0 : index
    %0 = vector.load %arg1[%c0, %c0_0] : memref<8x16xf32, #tpu.memory_space<vmem>>, vector<8x16xf32>
    %c0_1 = arith.constant 0 : index
    %c0_2 = arith.constant 0 : index
    %1 = vector.load %arg2[%c0_1, %c0_2] : memref<16x16xf32, #tpu.memory_space<vmem>>, vector<16x16xf32>
    %cst = arith.constant dense<0.000000e+00> : vector<8x16xf32>
    %2 = tpu.matmul %0, %1, %cst {dimension_numbers = #tpu.dot_dimension_numbers<[1], [0], [0], [1], [0, 0, 1, 1], [], []>, precision = #tpu.contract_precision<fp32>} : vector<8x16xf32>, vector<16x16xf32>, vector<8x16xf32> -> vector<8x16xf32>
    %cst_3 = arith.constant 2.000000e-01 : f32
    %3 = vector.broadcast %cst_3 : f32 to vector<8x16xf32>
    %4 = arith.mulf %2, %3 : vector<8x16xf32>
    %c0_4 = arith.constant 0 : index
    %c0_5 = arith.constant 0 : index
    %5 = vector.load %arg4[%c0_4, %c0_5] : memref<8x16xf32, #tpu.memory_space<vmem>>, vector<8x16xf32>
    tpu.vector_store %arg4[%c0_4, %c0_5], %4 {strides = array<i32>} : memref<8x16xf32, #tpu.memory_space<vmem>>, vector<8x16xf32>,
    %6 = arith.subf %0, %4 : vector<8x16xf32>
    %c0_6 = arith.constant 0 : index
    %c0_7 = arith.constant 0 : index
    %7 = vector.load %arg3[%c0_6, %c0_7] : memref<8x16xf32, #tpu.memory_space<vmem>>, vector<8x16xf32>
    tpu.vector_store %arg3[%c0_6, %c0_7], %6 {strides = array<i32>} : memref<8x16xf32, #tpu.memory_space<vmem>>, vector<8x16xf32>,
    return
  }
  func.func @transform_0(%arg0: i32) -> (i32, i32) {
    %c0_i32 = arith.constant 0 : i32
    %c0_i32_0 = arith.constant 0 : i32
    return %arg0, %c0_i32 : i32, i32
  }
  func.func @transform_1(%arg0: i32) -> (i32, i32) {
    %c0_i32 = arith.constant 0 : i32
    %c0_i32_0 = arith.constant 0 : i32
    %c0_i32_1 = arith.constant 0 : i32
    return %c0_i32, %c0_i32_0 : i32, i32
  }
  func.func @transform_2(%arg0: i32) -> (i32, i32) {
    %c0_i32 = arith.constant 0 : i32
    %c0_i32_0 = arith.constant 0 : i32
    return %arg0, %c0_i32 : i32, i32
  }
  func.func @transform_3(%arg0: i32) -> (i32, i32) {
    %c0_i32 = arith.constant 0 : i32
    %c0_i32_0 = arith.constant 0 : i32
    return %arg0, %c0_i32 : i32, i32
  }
}

module attributes {stable_mosaic.version = 11 : i64} {
  func.func @_decomp_roll_kernel(%arg0: i32, %arg1: memref<8x128xf32, #tpu.memory_space<vmem>>, %arg2: memref<8x128xf32, #tpu.memory_space<vmem>>, %arg3: memref<8x128xf32, #tpu.memory_space<vmem>>) attributes {dimension_semantics = [#tpu.dimension_semantics<parallel>], iteration_bounds = array<i64: 1>, scalar_prefetch = 0 : i64, scratch_operands = 0 : i64, tpu.core_type = #tpu.core_type<tc>, window_params = [{transform_indices = @transform_0, window_bounds = array<i64: 8, 128>}, {transform_indices = @transform_1, window_bounds = array<i64: 8, 128>}, {transform_indices = @transform_2, window_bounds = array<i64: 8, 128>}]} {
    %c0 = arith.constant 0 : index
    %c0_0 = arith.constant 0 : index
    %0 = vector.load %arg1[%c0, %c0_0] : memref<8x128xf32, #tpu.memory_space<vmem>>, vector<8x128xf32>
    %1 = vector.extract_strided_slice %0 {offsets = [0, 0], sizes = [8, 1], strides = [1, 1]} : vector<8x128xf32> to vector<8x1xf32>
    %2 = vector.shape_cast %1 : vector<8x1xf32> to vector<8x1xf32>
    %3 = vector.broadcast %2 : vector<8x1xf32> to vector<8x128xf32>
    %4 = vector.extract_strided_slice %0 {offsets = [0, 15], sizes = [8, 1], strides = [1, 1]} : vector<8x128xf32> to vector<8x1xf32>
    %5 = vector.shape_cast %4 : vector<8x1xf32> to vector<8x1xf32>
    %6 = vector.broadcast %5 : vector<8x1xf32> to vector<8x128xf32>
    %7 = tpu.iota {dimensions = array<i32: 1>} : vector<8x128xi32>
    %c127_i32 = arith.constant 127 : i32
    %8 = tpu.dynamic_rotate %0 by %c127_i32 dim 1 : vector<8x128xf32>, i32 -> vector<8x128xf32>
    %c15_i32 = arith.constant 15 : i32
    %9 = vector.broadcast %c15_i32 : i32 to vector<8x128xi32>
    %10 = arith.cmpi sge, %7, %9 : vector<8x128xi32>
    %11 = arith.select %10, %6, %8 : vector<8x128xi1>, vector<8x128xf32>
    %12 = arith.addf %0, %11 : vector<8x128xf32>
    %c1_i32 = arith.constant 1 : i32
    %13 = tpu.dynamic_rotate %0 by %c1_i32 dim 1 : vector<8x128xf32>, i32 -> vector<8x128xf32>
    %c1_i32_1 = arith.constant 1 : i32
    %14 = vector.broadcast %c1_i32_1 : i32 to vector<8x128xi32>
    %15 = arith.cmpi slt, %7, %14 : vector<8x128xi32>
    %16 = arith.select %15, %3, %13 : vector<8x128xi1>, vector<8x128xf32>
    %17 = arith.addf %12, %16 : vector<8x128xf32>
    %c126_i32 = arith.constant 126 : i32
    %18 = tpu.dynamic_rotate %0 by %c126_i32 dim 1 : vector<8x128xf32>, i32 -> vector<8x128xf32>
    %c14_i32 = arith.constant 14 : i32
    %19 = vector.broadcast %c14_i32 : i32 to vector<8x128xi32>
    %20 = arith.cmpi sge, %7, %19 : vector<8x128xi32>
    %21 = arith.select %20, %6, %18 : vector<8x128xi1>, vector<8x128xf32>
    %22 = arith.addf %17, %21 : vector<8x128xf32>
    %c2_i32 = arith.constant 2 : i32
    %23 = tpu.dynamic_rotate %0 by %c2_i32 dim 1 : vector<8x128xf32>, i32 -> vector<8x128xf32>
    %c2_i32_2 = arith.constant 2 : i32
    %24 = vector.broadcast %c2_i32_2 : i32 to vector<8x128xi32>
    %25 = arith.cmpi slt, %7, %24 : vector<8x128xi32>
    %26 = arith.select %25, %3, %23 : vector<8x128xi1>, vector<8x128xf32>
    %27 = arith.addf %22, %26 : vector<8x128xf32>
    %cst = arith.constant 2.000000e-01 : f32
    %28 = vector.broadcast %cst : f32 to vector<8x128xf32>
    %29 = arith.mulf %27, %28 : vector<8x128xf32>
    %c0_3 = arith.constant 0 : index
    %c0_4 = arith.constant 0 : index
    %30 = vector.load %arg3[%c0_3, %c0_4] : memref<8x128xf32, #tpu.memory_space<vmem>>, vector<8x128xf32>
    tpu.vector_store %arg3[%c0_3, %c0_4], %29 {strides = array<i32>} : memref<8x128xf32, #tpu.memory_space<vmem>>, vector<8x128xf32>,
    %31 = arith.subf %0, %29 : vector<8x128xf32>
    %c0_5 = arith.constant 0 : index
    %c0_6 = arith.constant 0 : index
    %32 = vector.load %arg2[%c0_5, %c0_6] : memref<8x128xf32, #tpu.memory_space<vmem>>, vector<8x128xf32>
    tpu.vector_store %arg2[%c0_5, %c0_6], %31 {strides = array<i32>} : memref<8x128xf32, #tpu.memory_space<vmem>>, vector<8x128xf32>,
    return
  }
  func.func @transform_0(%arg0: i32) -> (i32, i32) {
    %c0_i32 = arith.constant 0 : i32
    %c0_i32_0 = arith.constant 0 : i32
    return %arg0, %c0_i32 : i32, i32
  }
  func.func @transform_1(%arg0: i32) -> (i32, i32) {
    %c0_i32 = arith.constant 0 : i32
    %c0_i32_0 = arith.constant 0 : i32
    return %arg0, %c0_i32 : i32, i32
  }
  func.func @transform_2(%arg0: i32) -> (i32, i32) {
    %c0_i32 = arith.constant 0 : i32
    %c0_i32_0 = arith.constant 0 : i32
    return %arg0, %c0_i32 : i32, i32
  }
}

</mosaic_0001>

<llo_original>
// kernel: tpu_custom_call.1
$region0: #{tpu_custom_call.1}
  #allocation0 [shape = 'u32[]', space=smem, size = 0x4, offset = 0x4, fixed_abs, tag = 'smem constant byte address 0x4 - core index']
  #allocation1 [shape = 'u32[72,128]{1,0:T(1,128)}', space=vmem, size = 0x9000, scoped, tag = 'internal scratch']
  %s0 = inlined_call_operand.hbm [shape: f32[8,16], index: 0, kind: input, shape index: {}]
  %s1 = inlined_call_operand.hbm [shape: f32[16,16], index: 1, kind: input, shape index: {}]
  %s2 = inlined_call_operand.hbm [shape: f32[8,16], index: 2, kind: output, shape index: {0}]
  %s3 = inlined_call_operand.hbm [shape: f32[8,16], index: 3, kind: output, shape index: {1}]
  %4 = xla_tuple %s2, %s3
  %s5 = sld [smem:[#allocation0]]
  $region34: #{tpu_custom_call.1} parent=0
    _
  %s7 = ssub.s32 1, %s5
  %s8 = scalar_select 0, %s7, %s5
  $region1: #{tpu_custom_call.1} parent=0
    #allocation2 [shape = 'u8[4096]{0}', space=vmem, size = 0x1000, scoped, tag = 'input window, operand 0, single buffered']
    #allocation3 [shape = 's32[1]{0}', space=sflag, size = 0x4, scoped, tag = 'scoped memory for tpu_custom_call.1']
    #allocation4 [shape = 's32[1]{0}', space=sflag, size = 0x4, scoped, tag = 'scoped memory for tpu_custom_call.1']
    #allocation5 [shape = 'u8[8192]{0}', space=vmem, size = 0x2000, scoped, tag = 'input window, operand 1, single buffered']
    #allocation6 [shape = 's32[1]{0}', space=sflag, size = 0x4, scoped, tag = 'scoped memory for tpu_custom_call.1']
    #allocation7 [shape = 'u8[4096]{0}', space=vmem, size = 0x1000, scoped, tag = 'output window, operand 0, single buffered']
    #allocation8 [shape = 'u8[4096]{0}', space=vmem, size = 0x1000, scoped, tag = 'output window, operand 1, single buffered']
    #allocation9 [shape = 's32[1]{0}', space=sflag, size = 0x4, scoped, tag = 'scoped memory for tpu_custom_call.1']
    %9 = vsyncpa [#allocation3], 0
    %10 = vsyncpa [#allocation6], 0
    %11 = vsyncpa [#allocation4], 0
    %12 = vsyncpa [#allocation9], 0
    // Predicated region
    $region2: #{tpu_custom_call.1} parent=1 // pred_check
      _
    $region3: #{tpu_custom_call.1} parent=1 // pred_check_branch
      %14 = sbr.rel (0) target = $region5
    $region4: #{tpu_custom_call.1} parent=1 // pred_region
      %16 = vsyncadd [#allocation3], 0
      %s18 = sshll.u32 %s0, 4
      %s19 = int_to_ptr.hbm [resolvable:$true] %s18
      %s20 = sshll.u32 [#allocation2], 4
      %s21 = int_to_ptr.vmem [resolvable:$true] %s20
      %23 = dma.hbm_to_vmem [thread:$0]  %s19, 128, %s21, [#allocation3]
    $region5: #{tpu_custom_call.1} parent=1 // pred_fallthru
      _
    // Predicated region
    $region6: #{tpu_custom_call.1} parent=1 // pred_check
      _
    $region7: #{tpu_custom_call.1} parent=1 // pred_check_branch
      %25 = sbr.rel (0) target = $region9
    $region8: #{tpu_custom_call.1} parent=1 // pred_region
      %27 = vsyncadd [#allocation6], 0
      %s28 = sshll.u32 %s1, 4
      %s29 = int_to_ptr.hbm [resolvable:$true] %s28
      %s30 = sshll.u32 [#allocation5], 4
      %s31 = int_to_ptr.vmem [resolvable:$true] %s30
      %36 = dma.hbm_to_vmem [thread:$0]  %s29, 256, %s31, [#allocation6], 128, 128, 8
    $region9: #{tpu_custom_call.1} parent=1 // pred_fallthru
      _
    // Predicated region
    $region10: #{tpu_custom_call.1} parent=1 // pred_check
      _
    $region11: #{tpu_custom_call.1} parent=1 // pred_check_branch
      %38 = sbr.rel (0) target = $region13
    $region12: #{tpu_custom_call.1} parent=1 // pred_region
      %40 = dma.done [#allocation3], 128
    $region13: #{tpu_custom_call.1} parent=1 // pred_fallthru
      _
    // Predicated region
    $region14: #{tpu_custom_call.1} parent=1 // pred_check
      _
    $region15: #{tpu_custom_call.1} parent=1 // pred_check_branch
      %42 = sbr.rel (0) target = $region17
    $region16: #{tpu_custom_call.1} parent=1 // pred_region
      %44 = dma.done [#allocation6], 256
    $region17: #{tpu_custom_call.1} parent=1 // pred_fallthru
      _
    %v45 = vld [vmem:[#allocation2] sm:$0xff]
    %v46 = vld [vmem:[#allocation5] sm:$0xff]
    %v47 = vld [vmem:[#allocation5 + $0x8] sm:$0xff]
    %vm48 = vcmask 130048
    %v50 = vsel %vm48, %v45, 0
    %52 = vmatpush.msra.mxu0 0.0
    %53 = vmatpush.msra.mxu0 0.0
    %54 = vmatpush.msra.mxu0 0.0
    %55 = vmatpush.msra.mxu0 0.0
    %56 = vmatpush.msra.mxu0 0.0
    %57 = vmatpush.msra.mxu0 0.0
    %58 = vmatpush.msra.mxu0 0.0
    %59 = vmatpush.msra.mxu0 0.0
    %60 = vmatpush.msra.mxu0 0.0
    %61 = vmatpush.msra.mxu0 0.0
    %62 = vmatpush.msra.mxu0 0.0
    %63 = vmatpush.msra.mxu0 0.0
    %64 = vmatpush.msra.mxu0 0.0
    %65 = vmatpush.msra.mxu0 0.0
    %v66 = vand.u32 %v47, 4294901760
    %67 = vmatpush.msra.mxu0 %v66
    %v68 = vand.u32 %v46, 4294901760
    %69 = vmatpush.msra.mxu0 %v68
    %v70 = vand.u32 %v50, 4294901760
    %v71 = vsub.f32 %v50, %v70
    %v72 = vand.u32 %v71, 4294901760
    %v73 = vsub.f32 %v71, %v72
    %v74 = vand.u32 %v73, 4294901760
    %75 = vmatmul.f32.gmra.mxu0 %v74
    %v76 = vpop.f32.mrf.mxu0
    %v77 = vadd.f32 0.0, %v76
    %78 = vdwg.mxu0
    %79 = vmatpush.msra.mxu0 0.0
    %80 = vmatpush.msra.mxu0 0.0
    %81 = vmatpush.msra.mxu0 0.0
    %82 = vmatpush.msra.mxu0 0.0
    %83 = vmatpush.msra.mxu0 0.0
    %84 = vmatpush.msra.mxu0 0.0
    %85 = vmatpush.msra.mxu0 0.0
    %86 = vmatpush.msra.mxu0 0.0
    %87 = vmatpush.msra.mxu0 0.0
    %88 = vmatpush.msra.mxu0 0.0
    %89 = vmatpush.msra.mxu0 0.0
    %90 = vmatpush.msra.mxu0 0.0
    %91 = vmatpush.msra.mxu0 0.0
    %92 = vmatpush.msra.mxu0 0.0
    %v93 = vand.u32 %v47, 4294901760
    %v94 = vsub.f32 %v47, %v93
    %v95 = vand.u32 %v94, 4294901760
    %v96 = vsub.f32 %v94, %v95
    %v97 = vand.u32 %v96, 4294901760
    %98 = vmatpush.msra.mxu0 %v97
    %v99 = vand.u32 %v46, 4294901760
    %v100 = vsub.f32 %v46, %v99
    %v101 = vand.u32 %v100, 4294901760
    %v102 = vsub.f32 %v100, %v101
    %v103 = vand.u32 %v102, 4294901760
    %104 = vmatpush.msra.mxu0 %v103
    %v105 = vand.u32 %v50, 4294901760
    %106 = vmatmul.f32.gmra.mxu0 %v105
    %v107 = vpop.f32.mrf.mxu0
    %v108 = vadd.f32 %v77, %v107
    %109 = vdwg.mxu0
    %110 = vmatpush.msra.mxu0 0.0
    %111 = vmatpush.msra.mxu0 0.0
    %112 = vmatpush.msra.mxu0 0.0
    %113 = vmatpush.msra.mxu0 0.0
    %114 = vmatpush.msra.mxu0 0.0
    %115 = vmatpush.msra.mxu0 0.0
    %116 = vmatpush.msra.mxu0 0.0
    %117 = vmatpush.msra.mxu0 0.0
    %118 = vmatpush.msra.mxu0 0.0
    %119 = vmatpush.msra.mxu0 0.0
    %120 = vmatpush.msra.mxu0 0.0
    %121 = vmatpush.msra.mxu0 0.0
    %122 = vmatpush.msra.mxu0 0.0
    %123 = vmatpush.msra.mxu0 0.0
    %v124 = vand.u32 %v47, 4294901760
    %v125 = vsub.f32 %v47, %v124
    %126 = vmatpush.msra.mxu0 %v125
    %v127 = vand.u32 %v46, 4294901760
    %v128 = vsub.f32 %v46, %v127
    %129 = vmatpush.msra.mxu0 %v128
    %v130 = vand.u32 %v50, 4294901760
    %v131 = vsub.f32 %v50, %v130
    %132 = vmatmul.f32.gmra.mxu0 %v131
    %v133 = vpop.f32.mrf.mxu0
    %v134 = vadd.f32 %v108, %v133
    %135 = vdwg.mxu0
    %136 = vmatpush.msra.mxu0 0.0
    %137 = vmatpush.msra.mxu0 0.0
    %138 = vmatpush.msra.mxu0 0.0
    %139 = vmatpush.msra.mxu0 0.0
    %140 = vmatpush.msra.mxu0 0.0
    %141 = vmatpush.msra.mxu0 0.0
    %142 = vmatpush.msra.mxu0 0.0
    %143 = vmatpush.msra.mxu0 0.0
    %144 = vmatpush.msra.mxu0 0.0
    %145 = vmatpush.msra.mxu0 0.0
    %146 = vmatpush.msra.mxu0 0.0
    %147 = vmatpush.msra.mxu0 0.0
    %148 = vmatpush.msra.mxu0 0.0
    %149 = vmatpush.msra.mxu0 0.0
    %v150 = vand.u32 %v47, 4294901760
    %151 = vmatpush.msra.mxu0 %v150
    %v152 = vand.u32 %v46, 4294901760
    %153 = vmatpush.msra.mxu0 %v152
    %v154 = vand.u32 %v50, 4294901760
    %v155 = vsub.f32 %v50, %v154
    %v156 = vand.u32 %v155, 4294901760
    %157 = vmatmul.f32.gmra.mxu0 %v156
    %v158 = vpop.f32.mrf.mxu0
    %v159 = vadd.f32 %v134, %v158
    %160 = vdwg.mxu0
    %161 = vmatpush.msra.mxu0 0.0
    %162 = vmatpush.msra.mxu0 0.0
    %163 = vmatpush.msra.mxu0 0.0
    %164 = vmatpush.msra.mxu0 0.0
    %165 = vmatpush.msra.mxu0 0.0
    %166 = vmatpush.msra.mxu0 0.0
    %167 = vmatpush.msra.mxu0 0.0
    %168 = vmatpush.msra.mxu0 0.0
    %169 = vmatpush.msra.mxu0 0.0
    %170 = vmatpush.msra.mxu0 0.0
    %171 = vmatpush.msra.mxu0 0.0
    %172 = vmatpush.msra.mxu0 0.0
    %173 = vmatpush.msra.mxu0 0.0
    %174 = vmatpush.msra.mxu0 0.0
    %v175 = vand.u32 %v47, 4294901760
    %v176 = vsub.f32 %v47, %v175
    %v177 = vand.u32 %v176, 4294901760
    %178 = vmatpush.msra.mxu0 %v177
    %v179 = vand.u32 %v46, 4294901760
    %v180 = vsub.f32 %v46, %v179
    %v181 = vand.u32 %v180, 4294901760
    %182 = vmatpush.msra.mxu0 %v181
    %v183 = vand.u32 %v50, 4294901760
    %184 = vmatmul.f32.gmra.mxu0 %v183
    %v185 = vpop.f32.mrf.mxu0
    %v186 = vadd.f32 %v159, %v185
    %187 = vdwg.mxu0
    %188 = vmatpush.msra.mxu0 0.0
    %189 = vmatpush.msra.mxu0 0.0
    %190 = vmatpush.msra.mxu0 0.0
    %191 = vmatpush.msra.mxu0 0.0
    %192 = vmatpush.msra.mxu0 0.0
    %193 = vmatpush.msra.mxu0 0.0
    %194 = vmatpush.msra.mxu0 0.0
    %195 = vmatpush.msra.mxu0 0.0
    %196 = vmatpush.msra.mxu0 0.0
    %197 = vmatpush.msra.mxu0 0.0
    %198 = vmatpush.msra.mxu0 0.0
    %199 = vmatpush.msra.mxu0 0.0
    %200 = vmatpush.msra.mxu0 0.0
    %201 = vmatpush.msra.mxu0 0.0
    %v202 = vand.u32 %v47, 4294901760
    %203 = vmatpush.msra.mxu0 %v202
    %v204 = vand.u32 %v46, 4294901760
    %205 = vmatpush.msra.mxu0 %v204
    %v206 = vand.u32 %v50, 4294901760
    %207 = vmatmul.f32.gmra.mxu0 %v206
    %v208 = vpop.f32.mrf.mxu0
    %v209 = vadd.f32 %v186, %v208
    %210 = vdwg.mxu0
    %v211 = vmul.f32 %v209, 0.2
    %212 = vst.msk [vmem:[#allocation8] sm:$0xff] %vm48, %v211
    %v213 = vsub.f32 %v45, %v211
    %214 = vst.msk [vmem:[#allocation7] sm:$0xff] %vm48, %v213
    // Predicated region
    $region18: #{tpu_custom_call.1} parent=1 // pred_check
      _
    $region19: #{tpu_custom_call.1} parent=1 // pred_check_branch
      %216 = sbr.rel (0) target = $region21
    $region20: #{tpu_custom_call.1} parent=1 // pred_region
      %218 = vsyncadd [#allocation4], 0
      %s220 = sshll.u32 [#allocation7], 4
      %s221 = int_to_ptr.vmem [resolvable:$true] %s220
      %s222 = sshll.u32 %s2, 4
      %s223 = int_to_ptr.hbm [resolvable:$true] %s222
      %225 = dma.vmem_to_hbm [thread:$0]  %s221, 128, %s223, [#allocation4]
    $region21: #{tpu_custom_call.1} parent=1 // pred_fallthru
      _
    // Predicated region
    $region22: #{tpu_custom_call.1} parent=1 // pred_check
      _
    $region23: #{tpu_custom_call.1} parent=1 // pred_check_branch
      %227 = sbr.rel (0) target = $region25
    $region24: #{tpu_custom_call.1} parent=1 // pred_region
      %229 = vsyncadd [#allocation9], 0
      %s231 = sshll.u32 [#allocation8], 4
      %s232 = int_to_ptr.vmem [resolvable:$true] %s231
      %s233 = sshll.u32 %s3, 4
      %s234 = int_to_ptr.hbm [resolvable:$true] %s233
      %236 = dma.vmem_to_hbm [thread:$0]  %s232, 128, %s234, [#allocation9]
    $region25: #{tpu_custom_call.1} parent=1 // pred_fallthru
      _
    // Predicated region
    $region26: #{tpu_custom_call.1} parent=1 // pred_check
      _
    $region27: #{tpu_custom_call.1} parent=1 // pred_check_branch
      %238 = sbr.rel (0) target = $region29
    $region28: #{tpu_custom_call.1} parent=1 // pred_region
      %240 = dma.done [#allocation4], 128
    $region29: #{tpu_custom_call.1} parent=1 // pred_fallthru
      _
    // Predicated region
    $region30: #{tpu_custom_call.1} parent=1 // pred_check
      _
    $region31: #{tpu_custom_call.1} parent=1 // pred_check_branch
      %242 = sbr.rel (0) target = $region33
    $region32: #{tpu_custom_call.1} parent=1 // pred_region
      %244 = dma.done [#allocation9], 128
    $region33: #{tpu_custom_call.1} parent=1 // pred_fallthru
      _
    %245 = vsyncpa [#allocation3], 1
    %246 = vsyncpa [#allocation6], 1
    %247 = vsyncpa [#allocation4], 1
    %248 = vsyncpa [#allocation9], 1

// kernel: tpu_custom_call.1
$region0: #{tpu_custom_call.1}
  #allocation0 [shape = 'u32[]', space=smem, size = 0x4, offset = 0x4, fixed_abs, tag = 'smem constant byte address 0x4 - core index']
  #allocation1 [shape = 'u32[72,128]{1,0:T(1,128)}', space=vmem, size = 0x9000, scoped, tag = 'internal scratch']
  %s0 = inlined_call_operand.hbm [shape: f32[8,128], index: 0, kind: input, shape index: {}]
  %s1 = inlined_call_operand.hbm [shape: f32[8,128], index: 1, kind: output, shape index: {0}]
  %s2 = inlined_call_operand.hbm [shape: f32[8,128], index: 2, kind: output, shape index: {1}]
  %3 = xla_tuple %s1, %s2
  %s4 = sld [smem:[#allocation0]]
  $region26: #{tpu_custom_call.1} parent=0
    _
  %s6 = ssub.s32 1, %s4
  %s7 = scalar_select 0, %s6, %s4
  $region1: #{tpu_custom_call.1} parent=0
    #allocation2 [shape = 'u8[4096]{0}', space=vmem, size = 0x1000, scoped, tag = 'input window, operand 0, single buffered']
    #allocation3 [shape = 's32[1]{0}', space=sflag, size = 0x4, scoped, tag = 'scoped memory for tpu_custom_call.1']
    #allocation4 [shape = 's32[1]{0}', space=sflag, size = 0x4, scoped, tag = 'scoped memory for tpu_custom_call.1']
    #allocation5 [shape = 'u8[4096]{0}', space=vmem, size = 0x1000, scoped, tag = 'output window, operand 0, single buffered']
    #allocation6 [shape = 'u8[4096]{0}', space=vmem, size = 0x1000, scoped, tag = 'output window, operand 1, single buffered']
    #allocation7 [shape = 's32[1]{0}', space=sflag, size = 0x4, scoped, tag = 'scoped memory for tpu_custom_call.1']
    %8 = vsyncpa [#allocation3], 0
    %9 = vsyncpa [#allocation4], 0
    %10 = vsyncpa [#allocation7], 0
    // Predicated region
    $region2: #{tpu_custom_call.1} parent=1 // pred_check
      _
    $region3: #{tpu_custom_call.1} parent=1 // pred_check_branch
      %12 = sbr.rel (0) target = $region5
    $region4: #{tpu_custom_call.1} parent=1 // pred_region
      %14 = vsyncadd [#allocation3], 0
      %s16 = sshll.u32 %s0, 4
      %s17 = int_to_ptr.hbm [resolvable:$true] %s16
      %s18 = sshll.u32 [#allocation2], 4
      %s19 = int_to_ptr.vmem [resolvable:$true] %s18
      %21 = dma.hbm_to_vmem [thread:$0]  %s17, 128, %s19, [#allocation3]
    $region5: #{tpu_custom_call.1} parent=1 // pred_fallthru
      _
    // Predicated region
    $region6: #{tpu_custom_call.1} parent=1 // pred_check
      _
    $region7: #{tpu_custom_call.1} parent=1 // pred_check_branch
      %23 = sbr.rel (0) target = $region9
    $region8: #{tpu_custom_call.1} parent=1 // pred_region
      %25 = dma.done [#allocation3], 128
    $region9: #{tpu_custom_call.1} parent=1 // pred_fallthru
      _
    %v26 = vld [vmem:[#allocation2] sm:$0xff]
    %28 = vset.pattern.permute.xlu0 0
    %29 = vperm.xlu0 %28, %v26
    %v30 = vpop.permute.xlu0 %29
    %32 = vset.pattern.permute.xlu0 15
    %33 = vperm.xlu0 %32, %v26
    %v34 = vpop.permute.xlu0 %33
    %v36 = vlaneseq
    %v37 = vand.u32 %v36, 127
    %38 = vrot.lane.b32.xlu0 %v26, 127
    %v39 = vpop.permute.xlu0 %38
    %vm40 = vcmp.ge.s32.totalorder %v37, 15
    %v41 = vsel %vm40, %v34, %v39
    %v42 = vadd.f32 %v26, %v41
    %43 = vrot.lane.b32.xlu0 %v26, 1
    %v44 = vpop.permute.xlu0 %43
    %vm45 = vcmp.lt.s32.totalorder %v37, 1
    %v46 = vsel %vm45, %v30, %v44
    %v47 = vadd.f32 %v42, %v46
    %48 = vrot.lane.b32.xlu0 %v26, 126
    %v49 = vpop.permute.xlu0 %48
    %vm50 = vcmp.ge.s32.totalorder %v37, 14
    %v51 = vsel %vm50, %v34, %v49
    %v52 = vadd.f32 %v47, %v51
    %53 = vrot.lane.b32.xlu0 %v26, 2
    %v54 = vpop.permute.xlu0 %53
    %vm55 = vcmp.lt.s32.totalorder %v37, 2
    %v56 = vsel %vm55, %v30, %v54
    %v57 = vadd.f32 %v52, %v56
    %v58 = vmul.f32 %v57, 0.2
    %59 = vst [vmem:[#allocation6] sm:$0xff] %v58
    %v60 = vsub.f32 %v26, %v58
    %61 = vst [vmem:[#allocation5] sm:$0xff] %v60
    // Predicated region
    $region10: #{tpu_custom_call.1} parent=1 // pred_check
      _
    $region11: #{tpu_custom_call.1} parent=1 // pred_check_branch
      %63 = sbr.rel (0) target = $region13
    $region12: #{tpu_custom_call.1} parent=1 // pred_region
      %65 = vsyncadd [#allocation4], 0
      %s67 = sshll.u32 [#allocation5], 4
      %s68 = int_to_ptr.vmem [resolvable:$true] %s67
      %s69 = sshll.u32 %s1, 4
      %s70 = int_to_ptr.hbm [resolvable:$true] %s69
      %72 = dma.vmem_to_hbm [thread:$0]  %s68, 128, %s70, [#allocation4]
    $region13: #{tpu_custom_call.1} parent=1 // pred_fallthru
      _
    // Predicated region
    $region14: #{tpu_custom_call.1} parent=1 // pred_check
      _
    $region15: #{tpu_custom_call.1} parent=1 // pred_check_branch
      %74 = sbr.rel (0) target = $region17
    $region16: #{tpu_custom_call.1} parent=1 // pred_region
      %76 = vsyncadd [#allocation7], 0
      %s78 = sshll.u32 [#allocation6], 4
      %s79 = int_to_ptr.vmem [resolvable:$true] %s78
      %s80 = sshll.u32 %s2, 4
      %s81 = int_to_ptr.hbm [resolvable:$true] %s80
      %83 = dma.vmem_to_hbm [thread:$0]  %s79, 128, %s81, [#allocation7]
    $region17: #{tpu_custom_call.1} parent=1 // pred_fallthru
      _
    // Predicated region
    $region18: #{tpu_custom_call.1} parent=1 // pred_check
      _
    $region19: #{tpu_custom_call.1} parent=1 // pred_check_branch
      %85 = sbr.rel (0) target = $region21
    $region20: #{tpu_custom_call.1} parent=1 // pred_region
      %87 = dma.done [#allocation4], 128
    $region21: #{tpu_custom_call.1} parent=1 // pred_fallthru
      _
    // Predicated region
    $region22: #{tpu_custom_call.1} parent=1 // pred_check
      _
    $region23: #{tpu_custom_call.1} parent=1 // pred_check_branch
      %89 = sbr.rel (0) target = $region25
    $region24: #{tpu_custom_call.1} parent=1 // pred_region
      %91 = dma.done [#allocation7], 128
    $region25: #{tpu_custom_call.1} parent=1 // pred_fallthru
      _
    %92 = vsyncpa [#allocation3], 1
    %93 = vsyncpa [#allocation4], 1
    %94 = vsyncpa [#allocation7], 1

</llo_original>
